<compile_context>
chip_gen: v7x
topology: tpu7x:2x2x1
jax: 0.10.0
libtpu: 0.0.40
codegen_flags: <defaults>
</compile_context>

<pallas_src>
from functools import partial

import jax
import jax.numpy as jnp
from jax.experimental import pallas as pl
from jax.experimental.pallas import tpu as pltpu


def fcnet_kernel(x_ref, w1_ref, b1_ref, w2_ref, b2_ref, out_ref):
    """Fused MLP forward: out = relu(x @ w1 + b1) @ w2 + b2.

    x/w1/w2 arrive as bf16 (MXU operands); accumulation, bias add and ReLU are
    done in f32 on the VPU.  All tiles are lane-dense (last dim multiple of
    128), so every store is a full-width vst.
    """
    # fc1: (TM, In) @ (In, H) -> f32 accumulator on the MXU.
    h = jnp.dot(x_ref[...], w1_ref[...], preferred_element_type=jnp.float32)
    h = jnp.maximum(h + b1_ref[...], 0.0)                 # f32 bias + ReLU (VPU)
    # fc2: feed the MXU bf16 again, accumulate in f32.
    o = jnp.dot(h.astype(jnp.bfloat16), w2_ref[...],
                preferred_element_type=jnp.float32)
    out_ref[...] = (o + b2_ref[...]).astype(out_ref.dtype)


def _round_up(n, m):
    return ((n + m - 1) // m) * m


def _pad2d(a, rows, cols):
    r, c = a.shape
    if r == rows and c == cols:
        return a
    return jnp.pad(a, ((0, rows - r), (0, cols - c)))


def _choose_batch_tile(batch):
    """Pick the batch tile tm (multiple of 8, capped at 512 rows).

    Large tiles amortize the ~0.35us per-grid-step overhead; when the batch is
    big enough we keep >= 2 grid steps so v7x's two TensorCores both get work
    on the "parallel" axis (v5e/v6e are single-TC, so extra steps are cheap).
    """
    batch_8 = _round_up(batch, 8)
    if batch_8 < 16:
        tm = batch_8                                         # too small to split
    else:
        tm = min(512, _round_up(pl.cdiv(batch_8, 2), 8))
    batch_p = _round_up(batch_8, tm)
    return tm, batch_p


def prepare_fcnet_params(w1, b1, w2, b2):
    """Pad weights to lane-dense (128-multiple) shapes and cast to bf16 ONCE.

    This is the per-model setup cost; `fcnet_forward` reuses the padded params
    on every call so no weight pad/cast traffic happens per forward pass.
    """
    input_size, hidden = w1.shape
    output_size = w2.shape[1]
    in_p = _round_up(input_size, 128)
    hid_p = _round_up(hidden, 128)
    out_p = _round_up(output_size, 128)

    # Cast before padding (pads write half the bytes in bf16). Zero padding is
    # mathematically neutral: padded K columns contribute 0, padded hidden
    # units are relu(0+0)=0 against zero w2 rows.
    w1_p = _pad2d(jnp.asarray(w1, jnp.bfloat16), in_p, hid_p)
    w2_p = _pad2d(jnp.asarray(w2, jnp.bfloat16), hid_p, out_p)
    b1_p = _pad2d(jnp.asarray(b1, jnp.float32).reshape(1, -1), 1, hid_p)
    b2_p = _pad2d(jnp.asarray(b2, jnp.float32).reshape(1, -1), 1, out_p)

    return {
        "w1": w1_p, "b1": b1_p, "w2": w2_p, "b2": b2_p,
        "input_size": input_size, "output_size": output_size,
    }


@partial(jax.jit, static_argnames=("input_size", "output_size", "out_dtype"))
def _fcnet_forward_padded(x, w1_p, b1_p, w2_p, b2_p, *,
                          input_size, output_size, out_dtype):
    """Jitted forward on pre-padded params: pad/cast x, run the fused kernel,
    slice the real (batch, output) result back out."""
    in_p, hid_p = w1_p.shape
    out_p = w2_p.shape[1]

    # Same contract as torch's x.view(-1, input_size).
    assert x.size % input_size == 0, "x cannot be reshaped to (-1, input_size)"
    x2d = x.reshape(-1, input_size)
    batch = x2d.shape[0]

    tm, batch_p = _choose_batch_tile(batch)
    nm = batch_p // tm

    # bf16 cast BEFORE pad; with allow_input_fusion the pad/cast producer can
    # fuse straight into the pallas_call input DMA (no separate padded copy).
    x_p = _pad2d(x2d.astype(jnp.bfloat16), batch_p, in_p)

    flops = 2 * batch_p * (in_p * hid_p + hid_p * out_p)
    out_bytes = jnp.dtype(out_dtype).itemsize
    bytes_accessed = (x_p.size * 2 + w1_p.size * 2 + w2_p.size * 2
                      + b1_p.size * 4 + b2_p.size * 4
                      + batch_p * out_p * out_bytes)

    out_padded = pl.pallas_call(
        fcnet_kernel,
        out_shape=jax.ShapeDtypeStruct((batch_p, out_p), out_dtype),
        grid=(nm,),
        in_specs=[
            pl.BlockSpec((tm, in_p), lambda i: (i, 0)),     # x: tiled over batch
            pl.BlockSpec((in_p, hid_p), lambda i: (0, 0)),  # w1: resident
            pl.BlockSpec((1, hid_p), lambda i: (0, 0)),     # b1: resident
            pl.BlockSpec((hid_p, out_p), lambda i: (0, 0)), # w2: resident
            pl.BlockSpec((1, out_p), lambda i: (0, 0)),     # b2: resident
        ],
        out_specs=pl.BlockSpec((tm, out_p), lambda i: (i, 0)),
        compiler_params=pltpu.CompilerParams(
            dimension_semantics=("parallel",),
            # Only x (input 0) benefits from fusing its pad/cast producer.
            allow_input_fusion=[True, False, False, False, False],
        ),
        cost_estimate=pl.CostEstimate(
            flops=flops, transcendentals=0, bytes_accessed=bytes_accessed),
    )(x_p, w1_p, b1_p, w2_p, b2_p)

    # Strip the lane/sublane padding.
    return out_padded[:batch, :output_size]


def fcnet_forward(x, params, out_dtype=jnp.float32):
    """Public forward: out = fc2(relu(fc1(x.view(-1, input_size))))."""
    return _fcnet_forward_padded(
        x, params["w1"], params["b1"], params["w2"], params["b2"],
        input_size=params["input_size"], output_size=params["output_size"],
        out_dtype=out_dtype)


def init_fcnet_params(key, input_size, hidden_size, output_size):
    """Deterministic init matching torch.nn.Linear's U(-1/sqrt(fan_in), ...)."""
    k1, k2, k3, k4 = jax.random.split(key, 4)
    bound1 = 1.0 / (input_size ** 0.5)
    bound2 = 1.0 / (hidden_size ** 0.5)
    w1 = jax.random.uniform(k1, (input_size, hidden_size), jnp.float32,
                            -bound1, bound1)
    b1 = jax.random.uniform(k2, (1, hidden_size), jnp.float32, -bound1, bound1)
    w2 = jax.random.uniform(k3, (hidden_size, output_size), jnp.float32,
                            -bound2, bound2)
    b2 = jax.random.uniform(k4, (1, output_size), jnp.float32, -bound2, bound2)
    return w1, b1, w2, b2


if __name__ == "__main__":
    # Small MNIST-like setup: x is NCHW (2, 1, 16, 16) -> input_size = 256.
    batch, channels, spatial = 2, 1, 16
    input_size = channels * spatial * spatial        # 256
    hidden_size = 128
    output_size = 10

    key = jax.random.PRNGKey(0)
    kx, kp = jax.random.split(key)
    x = jax.random.normal(kx, (batch, channels, spatial, spatial), jnp.float32)
    w1, b1, w2, b2 = init_fcnet_params(kp, input_size, hidden_size, output_size)

    # One-time padding/cast of the weights (hoisted out of the per-call path).
    params = prepare_fcnet_params(w1, b1, w2, b2)

    out = fcnet_forward(x, params)
    jax.block_until_ready(out)
    assert out.shape == (batch, output_size)

    # Reference 1: same bf16-operand / f32-accumulate math in plain JAX.
    x2d = x.reshape(-1, input_size)
    h_ref = jnp.maximum(
        jnp.dot(x2d.astype(jnp.bfloat16), w1.astype(jnp.bfloat16),
                preferred_element_type=jnp.float32) + b1, 0.0)
    ref_bf16 = jnp.dot(h_ref.astype(jnp.bfloat16), w2.astype(jnp.bfloat16),
                       preferred_element_type=jnp.float32) + b2
    assert jnp.allclose(out, ref_bf16, atol=1e-3, rtol=1e-3)

    # Reference 2: full-f32 math (the exact PyTorch semantics) within bf16
    # quantization tolerance of the MXU operands.
    ref_f32 = jnp.maximum(x2d @ w1 + b1, 0.0) @ w2 + b2
    assert jnp.allclose(out, ref_f32, atol=3e-2, rtol=3e-2)

    # Exercise a larger batch too, so the multi-step "parallel" grid path runs.
    xb = jax.random.normal(jax.random.PRNGKey(1), (300, input_size), jnp.float32)
    outb = fcnet_forward(xb, params)
    jax.block_until_ready(outb)
    refb = jnp.maximum(xb @ w1 + b1, 0.0) @ w2 + b2
    assert outb.shape == (300, output_size)
    assert jnp.allclose(outb, refb, atol=3e-2, rtol=3e-2)

    print("KERNEL_OK")
</pallas_src>

<mosaic_0001>
module attributes {stable_mosaic.version = 11 : i64} {
  func.func @fcnet_kernel(%arg0: i32, %arg1: memref<8x256xbf16, #tpu.memory_space<vmem>>, %arg2: memref<256x128xbf16, #tpu.memory_space<vmem>>, %arg3: memref<1x128xf32, #tpu.memory_space<vmem>>, %arg4: memref<128x128xbf16, #tpu.memory_space<vmem>>, %arg5: memref<1x128xf32, #tpu.memory_space<vmem>>, %arg6: memref<8x128xf32, #tpu.memory_space<vmem>>) attributes {dimension_semantics = [#tpu.dimension_semantics<parallel>], iteration_bounds = array<i64: 1>, scalar_prefetch = 0 : i64, scratch_operands = 0 : i64, tpu.core_type = #tpu.core_type<tc>, window_params = [{transform_indices = @transform_0, window_bounds = array<i64: 8, 256>}, {pipeline_mode = #tpu.pipeline_mode<synchronous>, transform_indices = @transform_1, window_bounds = array<i64: 256, 128>}, {pipeline_mode = #tpu.pipeline_mode<synchronous>, transform_indices = @transform_2, window_bounds = array<i64: 1, 128>}, {pipeline_mode = #tpu.pipeline_mode<synchronous>, transform_indices = @transform_3, window_bounds = array<i64: 128, 128>}, {pipeline_mode = #tpu.pipeline_mode<synchronous>, transform_indices = @transform_4, window_bounds = array<i64: 1, 128>}, {transform_indices = @transform_5, window_bounds = array<i64: 8, 128>}]} {
    %c0 = arith.constant 0 : index
    %c0_0 = arith.constant 0 : index
    %0 = vector.load %arg1[%c0, %c0_0] : memref<8x256xbf16, #tpu.memory_space<vmem>>, vector<8x256xbf16>
    %c0_1 = arith.constant 0 : index
    %c0_2 = arith.constant 0 : index
    %1 = vector.load %arg2[%c0_1, %c0_2] : memref<256x128xbf16, #tpu.memory_space<vmem>>, vector<256x128xbf16>
    %cst = arith.constant dense<0.000000e+00> : vector<8x128xf32>
    %2 = tpu.matmul %0, %1, %cst {dimension_numbers = #tpu.dot_dimension_numbers<[1], [0], [0], [1], [0, 0, 1, 1], [], []>} : vector<8x256xbf16>, vector<256x128xbf16>, vector<8x128xf32> -> vector<8x128xf32>
    %c0_3 = arith.constant 0 : index
    %c0_4 = arith.constant 0 : index
    %3 = vector.load %arg3[%c0_3, %c0_4] : memref<1x128xf32, #tpu.memory_space<vmem>>, vector<1x128xf32>
    %4 = vector.broadcast %3 : vector<1x128xf32> to vector<8x128xf32>
    %5 = arith.addf %2, %4 : vector<8x128xf32>
    %cst_5 = arith.constant 0.000000e+00 : f32
    %6 = vector.broadcast %cst_5 : f32 to vector<8x128xf32>
    %7 = arith.maximumf %5, %6 : vector<8x128xf32>
    %8 = arith.truncf %7 : vector<8x128xf32> to vector<8x128xbf16>
    %c0_6 = arith.constant 0 : index
    %c0_7 = arith.constant 0 : index
    %9 = vector.load %arg4[%c0_6, %c0_7] : memref<128x128xbf16, #tpu.memory_space<vmem>>, vector<128x128xbf16>
    %cst_8 = arith.constant dense<0.000000e+00> : vector<8x128xf32>
    %10 = tpu.matmul %8, %9, %cst_8 {dimension_numbers = #tpu.dot_dimension_numbers<[1], [0], [0], [1], [0, 0, 1, 1], [], []>} : vector<8x128xbf16>, vector<128x128xbf16>, vector<8x128xf32> -> vector<8x128xf32>
    %c0_9 = arith.constant 0 : index
    %c0_10 = arith.constant 0 : index
    %11 = vector.load %arg5[%c0_9, %c0_10] : memref<1x128xf32, #tpu.memory_space<vmem>>, vector<1x128xf32>
    %12 = vector.broadcast %11 : vector<1x128xf32> to vector<8x128xf32>
    %13 = arith.addf %10, %12 : vector<8x128xf32>
    %c0_11 = arith.constant 0 : index
    %c0_12 = arith.constant 0 : index
    %14 = vector.load %arg6[%c0_11, %c0_12] : memref<8x128xf32, #tpu.memory_space<vmem>>, vector<8x128xf32>
    tpu.vector_store %arg6[%c0_11, %c0_12], %13 {strides = array<i32>} : memref<8x128xf32, #tpu.memory_space<vmem>>, vector<8x128xf32>,
    return
  }
  func.func @transform_0(%arg0: i32) -> (i32, i32) {
    %c0_i32 = arith.constant 0 : i32
    %c0_i32_0 = arith.constant 0 : i32
    return %arg0, %c0_i32 : i32, i32
  }
  func.func @transform_1(%arg0: i32) -> (i32, i32) {
    %c0_i32 = arith.constant 0 : i32
    %c0_i32_0 = arith.constant 0 : i32
    %c0_i32_1 = arith.constant 0 : i32
    return %c0_i32, %c0_i32_0 : i32, i32
  }
  func.func @transform_2(%arg0: i32) -> (i32, i32) {
    %c0_i32 = arith.constant 0 : i32
    %c0_i32_0 = arith.constant 0 : i32
    %c0_i32_1 = arith.constant 0 : i32
    return %c0_i32, %c0_i32_0 : i32, i32
  }
  func.func @transform_3(%arg0: i32) -> (i32, i32) {
    %c0_i32 = arith.constant 0 : i32
    %c0_i32_0 = arith.constant 0 : i32
    %c0_i32_1 = arith.constant 0 : i32
    return %c0_i32, %c0_i32_0 : i32, i32
  }
  func.func @transform_4(%arg0: i32) -> (i32, i32) {
    %c0_i32 = arith.constant 0 : i32
    %c0_i32_0 = arith.constant 0 : i32
    %c0_i32_1 = arith.constant 0 : i32
    return %c0_i32, %c0_i32_0 : i32, i32
  }
  func.func @transform_5(%arg0: i32) -> (i32, i32) {
    %c0_i32 = arith.constant 0 : i32
    %c0_i32_0 = arith.constant 0 : i32
    return %arg0, %c0_i32 : i32, i32
  }
}

</mosaic_0001>

<llo_original>
// kernel: _fcnet_forward_padded.2
$region0: #{_fcnet_forward_padded.2}
  #allocation0 [shape = 'u32[]', space=smem, size = 0x4, offset = 0x4, fixed_abs, tag = 'smem constant byte address 0x4 - core index']
  #allocation1 [shape = 'u32[144,128]{1,0:T(1,128)}', space=vmem, size = 0x12000, scoped, tag = 'internal scratch']
  #allocation2 [shape = 'u32[2048]{0}', space=vmem, size = 0x2000, scoped, tag = 'scoped memory for _fcnet_forward_padded.2']
  #allocation3 [shape = 'u32[2048]{0}', space=vmem, size = 0x2000, scoped, tag = 'scoped memory for _fcnet_forward_padded.2']
  #allocation4 [shape = 'u32[2048]{0}', space=vmem, size = 0x2000, scoped, tag = 'scoped memory for _fcnet_forward_padded.2']
  #allocation5 [shape = 'u32[2048]{0}', space=vmem, size = 0x2000, scoped, tag = 'scoped memory for _fcnet_forward_padded.2']
  #allocation6 [shape = 'u32[2048]{0}', space=vmem, size = 0x2000, scoped, tag = 'scoped memory for _fcnet_forward_padded.2']
  %s0 = inlined_call_operand.hbm [shape: bf16[256,128], index: 0, kind: input, shape index: {}]
  %s1 = inlined_call_operand.vmem [shape: f32[1,128], index: 1, kind: input, shape index: {}]
  %s2 = inlined_call_operand.vmem [shape: bf16[128,128], index: 2, kind: input, shape index: {}]
  %s3 = inlined_call_operand.vmem [shape: f32[1,128], index: 3, kind: input, shape index: {}]
  %s4 = inlined_call_operand.vmem [shape: bf16[2,256], index: 4, kind: input, shape index: {}]
  %s5 = inlined_call_operand.<no memory space> [shape: bf16[], index: 5, kind: input, shape index: {}]
  %s6 = inlined_call_operand.vmem [shape: f32[8,128], index: 6, kind: output, shape index: {}]
  %s7 = sld [smem:[#allocation0]]
  $region34: #{_fcnet_forward_padded.2} parent=0
    _
  %s9 = ssub.s32 1, %s7
  %s10 = scalar_select 0, %s9, %s7
  %v11 = vstv %s5
  %v12 = vunpack.i.l.bf16 %v11
  %v14 = vunpack.i.h.bf16 %v11
  $region1: #{_fcnet_forward_padded.2} parent=0
    #allocation7 [shape = 'u8[65536]{0}', space=vmem, size = 0x10000, scoped, tag = 'input window, operand 1, single buffered']
    #allocation8 [shape = 's32[1]{0}', space=sflag, size = 0x4, scoped, tag = 'scoped memory for _fcnet_forward_padded.2']
    #allocation9 [shape = 'u8[4096]{0}', space=vmem, size = 0x1000, dematerialized = true, scoped, tag = 'FusionAdapter Buffer %fusion.1 = bf16[8,256]{1,0:T(8,128)(2,1)} fusion(%param_4.1, %param_5), kind=kLoop, calls=%fused_computation.1.clone, metadata={op_name="jit(_fcnet_forward_padded)/jit(_pad)/pad" stack_frame_id=11}']
    %16 = vsyncpa [#allocation8], 0
    // Predicated region
    $region2: #{_fcnet_forward_padded.2} parent=1 // pred_check
      _
    $region3: #{_fcnet_forward_padded.2} parent=1 // pred_check_branch
      %18 = sbr.rel (0) target = $region5
    $region4: #{_fcnet_forward_padded.2} parent=1 // pred_region
      _
    $region5: #{_fcnet_forward_padded.2} parent=1 // pred_fallthru
      _
    // Predicated region
    $region6: #{_fcnet_forward_padded.2} parent=1 // pred_check
      _
    $region7: #{_fcnet_forward_padded.2} parent=1 // pred_check_branch
      %20 = sbr.rel (0) target = $region9
    $region8: #{_fcnet_forward_padded.2} parent=1 // pred_region
      %s22 = ssub.s32 2048, 2048
      %23 = vsyncadd [#allocation8], %s22
      %s24 = sshll.u32 [#allocation7], 4
      %s25 = int_to_ptr.vmem [resolvable:$true] %s24
      %30 = dma.hbm_to_vmem [thread:$0]  %s0, 2048, %s25, [#allocation8], 64, 64, 4
    $region9: #{_fcnet_forward_padded.2} parent=1 // pred_fallthru
      _
    // Predicated region
    $region10: #{_fcnet_forward_padded.2} parent=1 // pred_check
      _
    $region11: #{_fcnet_forward_padded.2} parent=1 // pred_check_branch
      %32 = sbr.rel (0) target = $region13
    $region12: #{_fcnet_forward_padded.2} parent=1 // pred_region
      _
    $region13: #{_fcnet_forward_padded.2} parent=1 // pred_fallthru
      _
    // Predicated region
    $region14: #{_fcnet_forward_padded.2} parent=1 // pred_check
      _
    $region15: #{_fcnet_forward_padded.2} parent=1 // pred_check_branch
      %34 = sbr.rel (0) target = $region17
    $region16: #{_fcnet_forward_padded.2} parent=1 // pred_region
      _
    $region17: #{_fcnet_forward_padded.2} parent=1 // pred_fallthru
      _
    // Predicated region
    $region18: #{_fcnet_forward_padded.2} parent=1 // pred_check
      _
    $region19: #{_fcnet_forward_padded.2} parent=1 // pred_check_branch
      %36 = sbr.rel (0) target = $region21
    $region20: #{_fcnet_forward_padded.2} parent=1 // pred_region
      _
    $region21: #{_fcnet_forward_padded.2} parent=1 // pred_fallthru
      _
    // Predicated region
    $region22: #{_fcnet_forward_padded.2} parent=1 // pred_check
      _
    $region23: #{_fcnet_forward_padded.2} parent=1 // pred_check_branch
      %38 = sbr.rel (0) target = $region25
    $region24: #{_fcnet_forward_padded.2} parent=1 // pred_region
      %39 = dma.done [#allocation8], 2048
    $region25: #{_fcnet_forward_padded.2} parent=1 // pred_fallthru
      _
    %s41 = sor.u32 3, 1
    %s42 = sand.u32 %s41, 1
    %v43 = vld [vmem:[%s4] sm:%s42]
    %v44 = vunpack.c.l.bf16 %v43
    %v45 = vunpack.c.h.bf16 %v43
    %v46 = vlaneseq
    %v47 = vshrl.u32 %v46, 7
    %vm49 = vcmp.lt.s32.totalorder %v47, 2
    %v50 = vsel %vm49, %v44, %v12
    %v51 = vpack.c.bf16 0.0, %v50
    %53 = vst [vmem:[#allocation9] sm:$0xf] %v51
    %s54 = scalar_lea.vmem %s4, 1
    %s56 = sor.u32 3, 1
    %s57 = sand.u32 %s56, 1
    %v58 = vld [vmem:[%s54] sm:%s57]
    %v59 = vunpack.c.l.bf16 %v58
    %v60 = vunpack.c.h.bf16 %v58
    %v61 = vlaneseq
    %v62 = vshrl.u32 %v61, 7
    %vm64 = vcmp.lt.s32.totalorder %v62, 2
    %v65 = vsel %vm64, %v59, %v12
    %s66 = scalar_lea.vmem [#allocation9], 4
    %v67 = vpack.c.bf16 0.0, %v65
    %69 = vst [vmem:[%s66] sm:$0xf] %v67
    %v71 = vld [vmem:[#allocation9] sm:$0xff]
    %v72 = vld [vmem:[#allocation7] sm:$0xf]
    %v73 = vld [vmem:[#allocation7 + $0x4] sm:$0xf]
    %v74 = vld [vmem:[#allocation7 + $0x8] sm:$0xf]
    %v75 = vld [vmem:[#allocation7 + $0xc] sm:$0xf]
    %v76 = vld [vmem:[#allocation7 + $0x10] sm:$0xf]
    %v77 = vld [vmem:[#allocation7 + $0x14] sm:$0xf]
    %v78 = vld [vmem:[#allocation7 + $0x18] sm:$0xf]
    %v79 = vld [vmem:[#allocation7 + $0x1c] sm:$0xf]
    %v80 = vld [vmem:[#allocation7 + $0x20] sm:$0xf]
    %v81 = vld [vmem:[#allocation7 + $0x24] sm:$0xf]
    %v82 = vld [vmem:[#allocation7 + $0x28] sm:$0xf]
    %v83 = vld [vmem:[#allocation7 + $0x2c] sm:$0xf]
    %v84 = vld [vmem:[#allocation7 + $0x30] sm:$0xf]
    %v85 = vld [vmem:[#allocation7 + $0x34] sm:$0xf]
    %v86 = vld [vmem:[#allocation7 + $0x38] sm:$0xf]
    %v87 = vld [vmem:[#allocation7 + $0x3c] sm:$0xf]
    %v88 = vld [vmem:[#allocation7 + $0x40] sm:$0xf]
    %v89 = vld [vmem:[#allocation7 + $0x44] sm:$0xf]
    %v90 = vld [vmem:[#allocation7 + $0x48] sm:$0xf]
    %v91 = vld [vmem:[#allocation7 + $0x4c] sm:$0xf]
    %v92 = vld [vmem:[#allocation7 + $0x50] sm:$0xf]
    %v93 = vld [vmem:[#allocation7 + $0x54] sm:$0xf]
    %v94 = vld [vmem:[#allocation7 + $0x58] sm:$0xf]
    %v95 = vld [vmem:[#allocation7 + $0x5c] sm:$0xf]
    %v96 = vld [vmem:[#allocation7 + $0x60] sm:$0xf]
    %v97 = vld [vmem:[#allocation7 + $0x64] sm:$0xf]
    %v98 = vld [vmem:[#allocation7 + $0x68] sm:$0xf]
    %v99 = vld [vmem:[#allocation7 + $0x6c] sm:$0xf]
    %v100 = vld [vmem:[#allocation7 + $0x70] sm:$0xf]
    %v101 = vld [vmem:[#allocation7 + $0x74] sm:$0xf]
    %v102 = vld [vmem:[#allocation7 + $0x78] sm:$0xf]
    %v103 = vld [vmem:[#allocation7 + $0x7c] sm:$0xf]
    %v104 = vld [vmem:[%s1] sm:$0x1]
    %v106 = vlaneseq
    %v107 = vshrl.u32 %v106, 7
    %v108 = vsub.s32 0, %v107
    %v109 = vrot.slane %v104, %v108
    %v112 = vunpack.c.l.b16 %v71
    %v113 = vunpack.c.h.b16 %v71
    %v114 = vpack.c.b16 %v112, %v112
    %v115 = vpack.c.b16 %v113, %v113
    %v150 = vunpack.c.l.b16 %v72
    %v151 = vunpack.c.l.b16 %v73
    %v152 = vunpack.c.l.b16 %v74
    %v153 = vunpack.c.l.b16 %v75
    %v154 = vunpack.c.l.b16 %v76
    %v155 = vunpack.c.l.b16 %v77
    %v156 = vunpack.c.l.b16 %v78
    %v157 = vunpack.c.l.b16 %v79
    %v158 = vunpack.c.l.b16 %v80
    %v159 = vunpack.c.l.b16 %v81
    %v160 = vunpack.c.l.b16 %v82
    %v161 = vunpack.c.l.b16 %v83
    %v162 = vunpack.c.l.b16 %v84
    %v163 = vunpack.c.l.b16 %v85
    %v164 = vunpack.c.l.b16 %v86
    %v165 = vunpack.c.l.b16 %v87
    %v166 = vunpack.c.l.b16 %v88
    %v167 = vunpack.c.l.b16 %v89
    %v168 = vunpack.c.l.b16 %v90
    %v169 = vunpack.c.l.b16 %v91
    %v170 = vunpack.c.l.b16 %v92
    %v171 = vunpack.c.l.b16 %v93
    %v172 = vunpack.c.l.b16 %v94
    %v173 = vunpack.c.l.b16 %v95
    %v174 = vunpack.c.l.b16 %v96
    %v175 = vunpack.c.l.b16 %v97
    %v176 = vunpack.c.l.b16 %v98
    %v177 = vunpack.c.l.b16 %v99
    %v178 = vunpack.c.l.b16 %v100
    %v179 = vunpack.c.l.b16 %v101
    %v180 = vunpack.c.l.b16 %v102
    %v181 = vunpack.c.l.b16 %v103
    %v182 = vpack.c.b16 %v151, %v150
    %v183 = vpack.c.b16 %v153, %v152
    %v184 = vpack.c.b16 %v155, %v154
    %v185 = vpack.c.b16 %v157, %v156
    %v186 = vpack.c.b16 %v159, %v158
    %v187 = vpack.c.b16 %v161, %v160
    %v188 = vpack.c.b16 %v163, %v162
    %v189 = vpack.c.b16 %v165, %v164
    %v190 = vpack.c.b16 %v167, %v166
    %v191 = vpack.c.b16 %v169, %v168
    %v192 = vpack.c.b16 %v171, %v170
    %v193 = vpack.c.b16 %v173, %v172
    %v194 = vpack.c.b16 %v175, %v174
    %v195 = vpack.c.b16 %v177, %v176
    %v196 = vpack.c.b16 %v179, %v178
    %v197 = vpack.c.b16 %v181, %v180
    %214 = vmatprep.subr.bf16.mxu0 0
    %215 = vmatpush1.bf16.msra.mxu0 %v182
    %216 = vmatprep.subr.bf16.mxu0 0
    %217 = vmatpush1.bf16.msra.mxu0 %v183
    %218 = vmatprep.subr.bf16.mxu0 0
    %219 = vmatpush1.bf16.msra.mxu0 %v184
    %220 = vmatprep.subr.bf16.mxu0 0
    %221 = vmatpush1.bf16.msra.mxu0 %v185
    %222 = vmatprep.subr.bf16.mxu0 0
    %223 = vmatpush1.bf16.msra.mxu0 %v186
    %224 = vmatprep.subr.bf16.mxu0 0
    %225 = vmatpush1.bf16.msra.mxu0 %v187
    %226 = vmatprep.subr.bf16.mxu0 0
    %227 = vmatpush1.bf16.msra.mxu0 %v188
    %228 = vmatprep.subr.bf16.mxu0 0
    %229 = vmatpush1.bf16.msra.mxu0 %v189
    %230 = vmatprep.subr.bf16.mxu0 0
    %231 = vmatpush1.bf16.msra.mxu0 %v190
    %232 = vmatprep.subr.bf16.mxu0 0
    %233 = vmatpush1.bf16.msra.mxu0 %v191
    %234 = vmatprep.subr.bf16.mxu0 0
    %235 = vmatpush1.bf16.msra.mxu0 %v192
    %236 = vmatprep.subr.bf16.mxu0 0
    %237 = vmatpush1.bf16.msra.mxu0 %v193
    %238 = vmatprep.subr.bf16.mxu0 0
    %239 = vmatpush1.bf16.msra.mxu0 %v194
    %240 = vmatprep.subr.bf16.mxu0 0
    %241 = vmatpush1.bf16.msra.mxu0 %v195
    %242 = vmatprep.subr.bf16.mxu0 0
    %243 = vmatpush1.bf16.msra.mxu0 %v196
    %244 = vmatprep.subr.bf16.mxu0 0
    %245 = vmatpush1.bf16.msra.mxu0 %v197
    %246 = vmatprep.mubr.bf16.mxu0 %v115
    %247 = vmatmul.mubr.bf16.gmra.mrb[0].mxu0 %v114
    %v248 = vpop.f32.mrb[0].mxu0
    %v249 = vadd.f32 %v109, %v248
    %v250 = vpop.f32.mrb[0].mxu0
    %v251 = vpop.f32.mrb[0].mxu0
    %v252 = vpop.f32.mrb[0].mxu0
    %253 = vdwg.mxu0
    %v254 = vmax.f32 %v249, 0.0
    %v255 = vpack.c.bf16 %v254, %v254
    %v256 = vld [vmem:[%s2] sm:$0xf]
    %v257 = vld [vmem:[%s2 + $0x4] sm:$0xf]
    %v258 = vld [vmem:[%s2 + $0x8] sm:$0xf]
    %v259 = vld [vmem:[%s2 + $0xc] sm:$0xf]
    %v260 = vld [vmem:[%s2 + $0x10] sm:$0xf]
    %v261 = vld [vmem:[%s2 + $0x14] sm:$0xf]
    %v262 = vld [vmem:[%s2 + $0x18] sm:$0xf]
    %v263 = vld [vmem:[%s2 + $0x1c] sm:$0xf]
    %v264 = vld [vmem:[%s2 + $0x20] sm:$0xf]
    %v265 = vld [vmem:[%s2 + $0x24] sm:$0xf]
    %v266 = vld [vmem:[%s2 + $0x28] sm:$0xf]
    %v267 = vld [vmem:[%s2 + $0x2c] sm:$0xf]
    %v268 = vld [vmem:[%s2 + $0x30] sm:$0xf]
    %v269 = vld [vmem:[%s2 + $0x34] sm:$0xf]
    %v270 = vld [vmem:[%s2 + $0x38] sm:$0xf]
    %v271 = vld [vmem:[%s2 + $0x3c] sm:$0xf]
    %v272 = vld [vmem:[%s3] sm:$0x1]
    %v274 = vlaneseq
    %v275 = vshrl.u32 %v274, 7
    %v276 = vsub.s32 0, %v275
    %v277 = vrot.slane %v272, %v276
    %v295 = vunpack.c.l.b16 %v256
    %v296 = vunpack.c.l.b16 %v257
    %v297 = vunpack.c.l.b16 %v258
    %v298 = vunpack.c.l.b16 %v259
    %v299 = vunpack.c.l.b16 %v260
    %v300 = vunpack.c.l.b16 %v261
    %v301 = vunpack.c.l.b16 %v262
    %v302 = vunpack.c.l.b16 %v263
    %v303 = vunpack.c.l.b16 %v264
    %v304 = vunpack.c.l.b16 %v265
    %v305 = vunpack.c.l.b16 %v266
    %v306 = vunpack.c.l.b16 %v267
    %v307 = vunpack.c.l.b16 %v268
    %v308 = vunpack.c.l.b16 %v269
    %v309 = vunpack.c.l.b16 %v270
    %v310 = vunpack.c.l.b16 %v271
    %v311 = vpack.c.b16 %v296, %v295
    %v312 = vpack.c.b16 %v298, %v297
    %v313 = vpack.c.b16 %v300, %v299
    %v314 = vpack.c.b16 %v302, %v301
    %v315 = vpack.c.b16 %v304, %v303
    %v316 = vpack.c.b16 %v306, %v305
    %v317 = vpack.c.b16 %v308, %v307
    %v318 = vpack.c.b16 %v310, %v309
    %327 = vmatprep.subr.bf16.mxu0 0
    %328 = vmatpush1.bf16.msra.mxu0 %v311
    %329 = vmatprep.subr.bf16.mxu0 0
    %330 = vmatpush1.bf16.msra.mxu0 %v312
    %331 = vmatprep.subr.bf16.mxu0 0
    %332 = vmatpush1.bf16.msra.mxu0 %v313
    %333 = vmatprep.subr.bf16.mxu0 0
    %334 = vmatpush1.bf16.msra.mxu0 %v314
    %335 = vmatprep.subr.bf16.mxu0 0
    %336 = vmatpush1.bf16.msra.mxu0 %v315
    %337 = vmatprep.subr.bf16.mxu0 0
    %338 = vmatpush1.bf16.msra.mxu0 %v316
    %339 = vmatprep.subr.bf16.mxu0 0
    %340 = vmatpush1.bf16.msra.mxu0 %v317
    %341 = vmatprep.subr.bf16.mxu0 0
    %342 = vmatpush1.bf16.msra.mxu0 %v318
    %343 = vmatprep.subr.bf16.mxu0 0
    %344 = vmatpush1.bf16.msra.mxu0 0
    %345 = vmatprep.subr.bf16.mxu0 0
    %346 = vmatpush1.bf16.msra.mxu0 0
    %347 = vmatprep.subr.bf16.mxu0 0
    %348 = vmatpush1.bf16.msra.mxu0 0
    %349 = vmatprep.subr.bf16.mxu0 0
    %350 = vmatpush1.bf16.msra.mxu0 0
    %351 = vmatprep.subr.bf16.mxu0 0
    %352 = vmatpush1.bf16.msra.mxu0 0
    %353 = vmatprep.subr.bf16.mxu0 0
    %354 = vmatpush1.bf16.msra.mxu0 0
    %355 = vmatprep.subr.bf16.mxu0 0
    %356 = vmatpush1.bf16.msra.mxu0 0
    %357 = vmatprep.subr.bf16.mxu0 0
    %358 = vmatpush1.bf16.msra.mxu0 0
    %359 = vmatprep.mubr.bf16.mxu0 0
    %360 = vmatmul.mubr.bf16.gmra.mrb[0].mxu0 %v255
    %v361 = vpop.f32.mrb[0].mxu0
    %v362 = vadd.f32 %v277, %v361
    %v363 = vpop.f32.mrb[0].mxu0
    %v364 = vpop.f32.mrb[0].mxu0
    %v365 = vpop.f32.mrb[0].mxu0
    %366 = vdwg.mxu0
    %367 = vst [vmem:[%s6] sm:$0xff] %v362
    // Predicated region
    $region26: #{_fcnet_forward_padded.2} parent=1 // pred_check
      _
    $region27: #{_fcnet_forward_padded.2} parent=1 // pred_check_branch
      %369 = sbr.rel (0) target = $region29
    $region28: #{_fcnet_forward_padded.2} parent=1 // pred_region
      _
    $region29: #{_fcnet_forward_padded.2} parent=1 // pred_fallthru
      _
    // Predicated region
    $region30: #{_fcnet_forward_padded.2} parent=1 // pred_check
      _
    $region31: #{_fcnet_forward_padded.2} parent=1 // pred_check_branch
      %371 = sbr.rel (0) target = $region33
    $region32: #{_fcnet_forward_padded.2} parent=1 // pred_region
      _
    $region33: #{_fcnet_forward_padded.2} parent=1 // pred_fallthru
      _
    %372 = vsyncpa [#allocation8], 1

</llo_original>
